<compile_context>
chip_gen: v6e
topology: v6e:2x2x1
jax: 0.10.0
libtpu: 0.0.40
codegen_flags: <defaults>
</compile_context>

<pallas_src>
import jax
import jax.numpy as jnp
from jax.experimental import pallas as pl
from jax.experimental.pallas import tpu as pltpu

STATE_DIM = 32
ACTION_DIM = 3
HIDDEN = 64
ACTION_STD = 0.5
BATCH = 8

LANES = 2 * HIDDEN                    # fused hidden width = 128 (one full vreg row)
OUT_W = 8                             # narrow I/O width (last dim = full array dim)

# 8-wide column layout
LOGP_COL = 0                          # output col 0: log_prob
VAL_COL = 1                           # output cols 1:1+A: state_value (also z's value cols)
ENT_COL = 4                           # output col 4: entropy
ACT_COL = 4                           # z / action cols 4:4+A: actor logits / action

# wide slab rows: [0:S) w1, [S:S+128) w2, row 160 b1, row 161 b2, rest zero pad
B1_ROW = STATE_DIM + LANES            # 160
B2_ROW = B1_ROW + 1                   # 161
WP_ROWS = 168                         # padded to a multiple of 8

# narrow slab rows: [0:128) w3, then b3 / inv_var / masks / constants, zero pad
ROW_B3 = LANES                        # 128
ROW_INVVAR = 129
ROW_MVAL = 130
ROW_MLOGP = 131
ROW_CONST = 132
NP_ROWS = 136


def _round_up(x, m):
    return ((x + m - 1) // m) * m


def _actor_critic_kernel(state_ref, action_ref, wp_ref, npk_ref, out_ref):
    # Loads are cast to f32 immediately (bf16-at-HBM stays HBM-only; v5e-safe math).
    x = state_ref[...].astype(jnp.float32)            # (Bb, S)
    a = action_ref[...].astype(jnp.float32)           # (Bb, 8); action at cols 4:4+A

    w1 = wp_ref[0:STATE_DIM, :]                        # (S, 128)
    w2 = wp_ref[STATE_DIM:STATE_DIM + LANES, :]        # (128, 128)
    b1 = wp_ref[B1_ROW:B1_ROW + 1, :]                  # (1, 128)
    b2 = wp_ref[B2_ROW:B2_ROW + 1, :]                  # (1, 128)

    w3 = npk_ref[0:LANES, :]                           # (128, 8) narrow layer-3
    b3 = npk_ref[ROW_B3:ROW_B3 + 1, :]                 # (1, 8)
    inv_var = npk_ref[ROW_INVVAR:ROW_INVVAR + 1, :]    # 1/var at actor cols, 0 elsewhere
    mask_val = npk_ref[ROW_MVAL:ROW_MVAL + 1, :]       # 1.0 at value cols
    mask_logp = npk_ref[ROW_MLOGP:ROW_MLOGP + 1, :]    # 1.0 at logp col
    const_vec = npk_ref[ROW_CONST:ROW_CONST + 1, :]    # logp_const @ col0, entropy @ col4

    # Fused actor+critic forward: two full 128-lane matmuls + one narrow projection.
    h = jnp.tanh(jnp.dot(x, w1, preferred_element_type=jnp.float32) + b1)   # (Bb, 128)
    h = jnp.tanh(jnp.dot(h, w2, preferred_element_type=jnp.float32) + b2)   # (Bb, 128)
    z = jnp.dot(h, w3, preferred_element_type=jnp.float32) + b3             # (Bb, 8)
    # z: critic value at cols VAL_COL:VAL_COL+A, actor logits at ACT_COL:ACT_COL+A.

    # Diagonal-covariance MultivariateNormal log_prob in the 8-wide domain;
    # inv_var zeroes every non-actor column, so no tiny slices are needed.
    mean = jax.nn.sigmoid(z)
    diff = a - mean
    maha = jnp.sum(diff * diff * inv_var, axis=-1, keepdims=True)           # (Bb, 1)

    # Output assembly with precomputed masks:
    #   col 0 = logp_const - 0.5*maha, cols 1:1+A = value, col 4 = entropy, rest 0.
    out = z * mask_val + const_vec - 0.5 * maha * mask_logp
    out_ref[...] = out.astype(out_ref.dtype)


def pack_params(p):
    """Pack per-layer params into one wide slab + one narrow slab (done once)."""
    A, S, H = ACTION_DIM, STATE_DIM, HIDDEN

    wp = jnp.zeros((WP_ROWS, LANES), jnp.float32)
    wp = wp.at[0:S, 0:H].set(p["aw1"]).at[0:S, H:].set(p["cw1"])
    wp = wp.at[S:S + H, 0:H].set(p["aw2"]).at[S + H:S + 2 * H, H:].set(p["cw2"])
    wp = wp.at[B1_ROW, 0:H].set(p["ab1"][0]).at[B1_ROW, H:].set(p["cb1"][0])
    wp = wp.at[B2_ROW, 0:H].set(p["ab2"][0]).at[B2_ROW, H:].set(p["cb2"][0])

    npk = jnp.zeros((NP_ROWS, OUT_W), jnp.float32)
    npk = npk.at[0:H, ACT_COL:ACT_COL + A].set(p["aw3"])        # actor hidden -> logit cols
    npk = npk.at[H:2 * H, VAL_COL:VAL_COL + A].set(p["cw3"])    # critic hidden -> value cols
    b3 = jnp.zeros((OUT_W,), jnp.float32)
    b3 = b3.at[ACT_COL:ACT_COL + A].set(p["ab3"][0]).at[VAL_COL:VAL_COL + A].set(p["cb3"][0])
    npk = npk.at[ROW_B3].set(b3)

    var = p["action_var"][0]                                    # (A,)
    inv_var = jnp.zeros((OUT_W,), jnp.float32).at[ACT_COL:ACT_COL + A].set(1.0 / var)
    npk = npk.at[ROW_INVVAR].set(inv_var)

    logdet = jnp.sum(jnp.log(var))
    log2pi = jnp.log(jnp.float32(2.0 * jnp.pi))
    logp_const = -0.5 * (logdet + A * log2pi)
    ent_const = 0.5 * A * (1.0 + log2pi) + 0.5 * logdet

    mask_val = jnp.zeros((OUT_W,), jnp.float32).at[VAL_COL:VAL_COL + A].set(1.0)
    mask_logp = jnp.zeros((OUT_W,), jnp.float32).at[LOGP_COL].set(1.0)
    const_vec = (jnp.zeros((OUT_W,), jnp.float32)
                 .at[LOGP_COL].set(logp_const).at[ENT_COL].set(ent_const))
    npk = npk.at[ROW_MVAL].set(mask_val).at[ROW_MLOGP].set(mask_logp).at[ROW_CONST].set(const_vec)
    return wp, npk


def actor_critic_evaluate(state, action, wp, npk, *, block_b=None, io_dtype=jnp.float32):
    """Pallas implementation of ActorCritic.evaluate.

    Returns (action_logprobs (B,), state_value (B, A), dist_entropy (B,)).
    (torch.squeeze on state_value is a no-op for B>1, A>1, so (B, A) matches the
    PyTorch semantics; the B==1 squeeze edge case is intentionally not replicated.)
    """
    B = state.shape[0]
    if block_b is None:
        # Up to 512 rows per tile (HBM-roofline sweet spot), but keep >= 2 grid steps
        # once the batch is big enough so v7x can shard across both TensorCores.
        block_b = min(512, _round_up(B, 8), _round_up(-(-B // 2), 8))
    block_b = max(block_b, 8)
    Bp = _round_up(B, block_b)

    # Layout plumbing only: pad batch to the tile size; place action at its
    # fused-network columns (cols 4:4+A of an 8-wide row) with a single pad.
    state_p = state.astype(io_dtype)
    if Bp > B:
        state_p = jnp.pad(state_p, ((0, Bp - B), (0, 0)))
    action_p = jnp.pad(action.astype(io_dtype),
                       ((0, Bp - B), (ACT_COL, OUT_W - ACT_COL - ACTION_DIM)))

    io_bytes = jnp.dtype(io_dtype).itemsize
    cost = pl.CostEstimate(
        flops=int(2 * Bp * (STATE_DIM * LANES + LANES * LANES + LANES * OUT_W)),
        transcendentals=int(Bp * (2 * LANES + OUT_W)),
        bytes_accessed=int(Bp * (STATE_DIM + 2 * OUT_W) * io_bytes
                           + (WP_ROWS * LANES + NP_ROWS * OUT_W) * 4),
    )

    out = pl.pallas_call(
        _actor_critic_kernel,
        out_shape=jax.ShapeDtypeStruct((Bp, OUT_W), io_dtype),
        grid=(Bp // block_b,),
        in_specs=[
            pl.BlockSpec((block_b, STATE_DIM), lambda i: (i, 0)),
            pl.BlockSpec((block_b, OUT_W), lambda i: (i, 0)),
            pl.BlockSpec((WP_ROWS, LANES), lambda i: (0, 0)),   # weights stay resident
            pl.BlockSpec((NP_ROWS, OUT_W), lambda i: (0, 0)),   # narrow slab stays resident
        ],
        out_specs=pl.BlockSpec((block_b, OUT_W), lambda i: (i, 0)),
        compiler_params=pltpu.CompilerParams(dimension_semantics=("parallel",)),
        cost_estimate=cost,
    )(state_p, action_p, wp, npk)

    out = out[:B].astype(jnp.float32)
    logp = out[:, LOGP_COL]
    value = out[:, VAL_COL:VAL_COL + ACTION_DIM]
    ent = out[:, ENT_COL]
    return logp, value, ent


def _init_linear(key, fan_in, fan_out):
    # Deterministic stand-in for PyTorch's default nn.Linear init:
    # U(-1/sqrt(fan_in), 1/sqrt(fan_in)); weight stored as (in, out).
    kw, kb = jax.random.split(key)
    bound = 1.0 / jnp.sqrt(jnp.float32(fan_in))
    w = jax.random.uniform(kw, (fan_in, fan_out), jnp.float32, -bound, bound)
    b = jax.random.uniform(kb, (1, fan_out), jnp.float32, -bound, bound)
    return w, b


def make_params(key):
    keys = jax.random.split(key, 6)
    aw1, ab1 = _init_linear(keys[0], STATE_DIM, HIDDEN)
    aw2, ab2 = _init_linear(keys[1], HIDDEN, HIDDEN)
    aw3, ab3 = _init_linear(keys[2], HIDDEN, ACTION_DIM)
    cw1, cb1 = _init_linear(keys[3], STATE_DIM, HIDDEN)
    cw2, cb2 = _init_linear(keys[4], HIDDEN, HIDDEN)
    cw3, cb3 = _init_linear(keys[5], HIDDEN, ACTION_DIM)
    action_var = jnp.full((1, ACTION_DIM), ACTION_STD * ACTION_STD, jnp.float32)
    return dict(aw1=aw1, ab1=ab1, aw2=aw2, ab2=ab2, aw3=aw3, ab3=ab3,
                cw1=cw1, cb1=cb1, cw2=cw2, cb2=cb2, cw3=cw3, cb3=cb3,
                action_var=action_var)


def _reference_evaluate(state, action, p):
    # Pure-JAX reference matching the PyTorch semantics (correctness check).
    h = jnp.tanh(state @ p["aw1"] + p["ab1"])
    h = jnp.tanh(h @ p["aw2"] + p["ab2"])
    mean = jax.nn.sigmoid(h @ p["aw3"] + p["ab3"])
    c = jnp.tanh(state @ p["cw1"] + p["cb1"])
    c = jnp.tanh(c @ p["cw2"] + p["cb2"])
    value = c @ p["cw3"] + p["cb3"]
    var = p["action_var"]
    D = mean.shape[-1]
    logdet = jnp.sum(jnp.log(var))
    maha = jnp.sum((action - mean) ** 2 / var, axis=-1)
    logp = -0.5 * (maha + logdet + D * jnp.log(2.0 * jnp.pi))
    ent = 0.5 * D * (1.0 + jnp.log(2.0 * jnp.pi)) + 0.5 * logdet
    return logp, value, jnp.full((state.shape[0],), ent)


if __name__ == "__main__":
    key = jax.random.PRNGKey(0)
    kp, ks, ka, ks2, ka2 = jax.random.split(key, 5)

    params = make_params(kp)
    wp, npk = pack_params(params)          # pack once, outside the hot path

    # Small-batch f32 path (B=8, single grid step).
    state = jax.random.normal(ks, (BATCH, STATE_DIM), jnp.float32)
    action = jax.random.uniform(ka, (BATCH, ACTION_DIM), jnp.float32)
    logp, value, ent = actor_critic_evaluate(state, action, wp, npk)
    jax.block_until_ready((logp, value, ent))
    r_logp, r_value, r_ent = _reference_evaluate(state, action, params)
    assert jnp.allclose(logp, r_logp, atol=1e-4, rtol=1e-4)
    assert jnp.allclose(value, r_value, atol=1e-4, rtol=1e-4)
    assert jnp.allclose(ent, r_ent, atol=1e-4, rtol=1e-4)

    # Larger batch exercising batch padding + a 2-step grid (v7x dual-TC path).
    B2 = 24
    state2 = jax.random.normal(ks2, (B2, STATE_DIM), jnp.float32)
    action2 = jax.random.uniform(ka2, (B2, ACTION_DIM), jnp.float32)
    logp2, value2, ent2 = actor_critic_evaluate(state2, action2, wp, npk)
    jax.block_until_ready((logp2, value2, ent2))
    r_logp2, r_value2, r_ent2 = _reference_evaluate(state2, action2, params)
    assert jnp.allclose(logp2, r_logp2, atol=1e-4, rtol=1e-4)
    assert jnp.allclose(value2, r_value2, atol=1e-4, rtol=1e-4)
    assert jnp.allclose(ent2, r_ent2, atol=1e-4, rtol=1e-4)

    # bf16-at-HBM path (halves remaining DMA bytes on v6e/v7x); loose tolerance.
    logp3, value3, ent3 = actor_critic_evaluate(state2, action2, wp, npk,
                                                io_dtype=jnp.bfloat16)
    jax.block_until_ready((logp3, value3, ent3))
    assert jnp.allclose(logp3, r_logp2, atol=2.5e-1, rtol=1e-1)
    assert jnp.allclose(value3, r_value2, atol=2.5e-1, rtol=1e-1)
    assert jnp.allclose(ent3, r_ent2, atol=2.5e-1, rtol=1e-1)

    print("KERNEL_OK")
</pallas_src>

<mosaic_0001>
module attributes {stable_mosaic.version = 11 : i64} {
  func.func @_actor_critic_kernel(%arg0: i32, %arg1: memref<8x32xf32, #tpu.memory_space<vmem>>, %arg2: memref<8x8xf32, #tpu.memory_space<vmem>>, %arg3: memref<168x128xf32, #tpu.memory_space<vmem>>, %arg4: memref<136x8xf32, #tpu.memory_space<vmem>>, %arg5: memref<8x8xf32, #tpu.memory_space<vmem>>) attributes {dimension_semantics = [#tpu.dimension_semantics<parallel>], iteration_bounds = array<i64: 1>, scalar_prefetch = 0 : i64, scratch_operands = 0 : i64, tpu.core_type = #tpu.core_type<tc>, window_params = [{transform_indices = @transform_0, window_bounds = array<i64: 8, 32>}, {transform_indices = @transform_1, window_bounds = array<i64: 8, 8>}, {pipeline_mode = #tpu.pipeline_mode<synchronous>, transform_indices = @transform_2, window_bounds = array<i64: 168, 128>}, {pipeline_mode = #tpu.pipeline_mode<synchronous>, transform_indices = @transform_3, window_bounds = array<i64: 136, 8>}, {transform_indices = @transform_4, window_bounds = array<i64: 8, 8>}]} {
    %c0 = arith.constant 0 : index
    %c0_0 = arith.constant 0 : index
    %0 = vector.load %arg1[%c0, %c0_0] : memref<8x32xf32, #tpu.memory_space<vmem>>, vector<8x32xf32>
    %c0_1 = arith.constant 0 : index
    %c0_2 = arith.constant 0 : index
    %1 = vector.load %arg2[%c0_1, %c0_2] : memref<8x8xf32, #tpu.memory_space<vmem>>, vector<8x8xf32>
    %c0_3 = arith.constant 0 : index
    %c0_4 = arith.constant 0 : index
    %2 = vector.load %arg3[%c0_3, %c0_4] : memref<168x128xf32, #tpu.memory_space<vmem>>, vector<32x128xf32>
    %c32 = arith.constant 32 : index
    %c0_5 = arith.constant 0 : index
    %3 = vector.load %arg3[%c32, %c0_5] : memref<168x128xf32, #tpu.memory_space<vmem>>, vector<128x128xf32>
    %c160 = arith.constant 160 : index
    %c0_6 = arith.constant 0 : index
    %4 = vector.load %arg3[%c160, %c0_6] : memref<168x128xf32, #tpu.memory_space<vmem>>, vector<1x128xf32>
    %c161 = arith.constant 161 : index
    %c0_7 = arith.constant 0 : index
    %5 = vector.load %arg3[%c161, %c0_7] : memref<168x128xf32, #tpu.memory_space<vmem>>, vector<1x128xf32>
    %c0_8 = arith.constant 0 : index
    %c0_9 = arith.constant 0 : index
    %6 = vector.load %arg4[%c0_8, %c0_9] : memref<136x8xf32, #tpu.memory_space<vmem>>, vector<128x8xf32>
    %c128 = arith.constant 128 : index
    %c0_10 = arith.constant 0 : index
    %7 = vector.load %arg4[%c128, %c0_10] : memref<136x8xf32, #tpu.memory_space<vmem>>, vector<1x8xf32>
    %c129 = arith.constant 129 : index
    %c0_11 = arith.constant 0 : index
    %8 = vector.load %arg4[%c129, %c0_11] : memref<136x8xf32, #tpu.memory_space<vmem>>, vector<1x8xf32>
    %c130 = arith.constant 130 : index
    %c0_12 = arith.constant 0 : index
    %9 = vector.load %arg4[%c130, %c0_12] : memref<136x8xf32, #tpu.memory_space<vmem>>, vector<1x8xf32>
    %c131 = arith.constant 131 : index
    %c0_13 = arith.constant 0 : index
    %10 = vector.load %arg4[%c131, %c0_13] : memref<136x8xf32, #tpu.memory_space<vmem>>, vector<1x8xf32>
    %c132 = arith.constant 132 : index
    %c0_14 = arith.constant 0 : index
    %11 = vector.load %arg4[%c132, %c0_14] : memref<136x8xf32, #tpu.memory_space<vmem>>, vector<1x8xf32>
    %cst = arith.constant dense<0.000000e+00> : vector<8x128xf32>
    %12 = tpu.matmul %0, %2, %cst {dimension_numbers = #tpu.dot_dimension_numbers<[1], [0], [0], [1], [0, 0, 1, 1], [], []>} : vector<8x32xf32>, vector<32x128xf32>, vector<8x128xf32> -> vector<8x128xf32>
    %13 = vector.broadcast %4 : vector<1x128xf32> to vector<8x128xf32>
    %14 = arith.addf %12, %13 : vector<8x128xf32>
    %15 = math.tanh %14 : vector<8x128xf32>
    %cst_15 = arith.constant dense<0.000000e+00> : vector<8x128xf32>
    %16 = tpu.matmul %15, %3, %cst_15 {dimension_numbers = #tpu.dot_dimension_numbers<[1], [0], [0], [1], [0, 0, 1, 1], [], []>} : vector<8x128xf32>, vector<128x128xf32>, vector<8x128xf32> -> vector<8x128xf32>
    %17 = vector.broadcast %5 : vector<1x128xf32> to vector<8x128xf32>
    %18 = arith.addf %16, %17 : vector<8x128xf32>
    %19 = math.tanh %18 : vector<8x128xf32>
    %cst_16 = arith.constant dense<0.000000e+00> : vector<8x8xf32>
    %20 = tpu.matmul %19, %6, %cst_16 {dimension_numbers = #tpu.dot_dimension_numbers<[1], [0], [0], [1], [0, 0, 1, 1], [], []>} : vector<8x128xf32>, vector<128x8xf32>, vector<8x8xf32> -> vector<8x8xf32>
    %21 = vector.broadcast %7 : vector<1x8xf32> to vector<8x8xf32>
    %22 = arith.addf %20, %21 : vector<8x8xf32>
    %23 = arith.negf %22 : vector<8x8xf32>
    %24 = math.exp %23 : vector<8x8xf32>
    %cst_17 = arith.constant 1.000000e+00 : f32
    %25 = vector.broadcast %cst_17 : f32 to vector<8x8xf32>
    %26 = arith.addf %25, %24 : vector<8x8xf32>
    %27 = arith.divf %25, %26 : vector<8x8xf32>
    %28 = arith.subf %1, %27 : vector<8x8xf32>
    %29 = arith.mulf %28, %28 : vector<8x8xf32>
    %30 = vector.broadcast %8 : vector<1x8xf32> to vector<8x8xf32>
    %31 = arith.mulf %29, %30 : vector<8x8xf32>
    %cst_18 = arith.constant dense<0.000000e+00> : vector<8xf32>
    %32 = vector.multi_reduction <add>, %31, %cst_18 [1] : vector<8x8xf32> to vector<8xf32>
    %33 = vector.shape_cast %32 : vector<8xf32> to vector<8x1xf32>
    %34 = vector.broadcast %9 : vector<1x8xf32> to vector<8x8xf32>
    %35 = arith.mulf %22, %34 : vector<8x8xf32>
    %36 = vector.broadcast %11 : vector<1x8xf32> to vector<8x8xf32>
    %37 = arith.addf %35, %36 : vector<8x8xf32>
    %cst_19 = arith.constant 5.000000e-01 : f32
    %38 = vector.broadcast %cst_19 : f32 to vector<8x1xf32>
    %39 = arith.mulf %38, %33 : vector<8x1xf32>
    %40 = vector.broadcast %39 : vector<8x1xf32> to vector<8x8xf32>
    %41 = vector.broadcast %10 : vector<1x8xf32> to vector<8x8xf32>
    %42 = arith.mulf %40, %41 : vector<8x8xf32>
    %43 = arith.subf %37, %42 : vector<8x8xf32>
    %c0_20 = arith.constant 0 : index
    %c0_21 = arith.constant 0 : index
    %44 = vector.load %arg5[%c0_20, %c0_21] : memref<8x8xf32, #tpu.memory_space<vmem>>, vector<8x8xf32>
    tpu.vector_store %arg5[%c0_20, %c0_21], %43 {strides = array<i32>} : memref<8x8xf32, #tpu.memory_space<vmem>>, vector<8x8xf32>,
    return
  }
  func.func @transform_0(%arg0: i32) -> (i32, i32) {
    %c0_i32 = arith.constant 0 : i32
    %c0_i32_0 = arith.constant 0 : i32
    return %arg0, %c0_i32 : i32, i32
  }
  func.func @transform_1(%arg0: i32) -> (i32, i32) {
    %c0_i32 = arith.constant 0 : i32
    %c0_i32_0 = arith.constant 0 : i32
    return %arg0, %c0_i32 : i32, i32
  }
  func.func @transform_2(%arg0: i32) -> (i32, i32) {
    %c0_i32 = arith.constant 0 : i32
    %c0_i32_0 = arith.constant 0 : i32
    %c0_i32_1 = arith.constant 0 : i32
    return %c0_i32, %c0_i32_0 : i32, i32
  }
  func.func @transform_3(%arg0: i32) -> (i32, i32) {
    %c0_i32 = arith.constant 0 : i32
    %c0_i32_0 = arith.constant 0 : i32
    %c0_i32_1 = arith.constant 0 : i32
    return %c0_i32, %c0_i32_0 : i32, i32
  }
  func.func @transform_4(%arg0: i32) -> (i32, i32) {
    %c0_i32 = arith.constant 0 : i32
    %c0_i32_0 = arith.constant 0 : i32
    return %arg0, %c0_i32 : i32, i32
  }
}

</mosaic_0001>

<llo_original>
// kernel: tpu_custom_call.1
$region0: #{tpu_custom_call.1}
  #allocation0 [shape = 'u32[]', space=smem, size = 0x4, offset = 0x4, fixed_abs, tag = 'smem constant byte address 0x4 - core index']
  #allocation1 [shape = 'u32[144,128]{1,0:T(1,128)}', space=vmem, size = 0x12000, scoped, tag = 'internal scratch']
  %s0 = inlined_call_operand.vmem [shape: f32[8,32], index: 0, kind: input, shape index: {}]
  %s1 = inlined_call_operand.vmem [shape: f32[8,8], index: 1, kind: input, shape index: {}]
  %s2 = inlined_call_operand.hbm [shape: f32[168,128], index: 2, kind: input, shape index: {}]
  %s3 = inlined_call_operand.vmem [shape: f32[136,8], index: 3, kind: input, shape index: {}]
  %s4 = inlined_call_operand.hbm [shape: f32[8,8], index: 4, kind: output, shape index: {}]
  %s5 = sld [smem:[#allocation0]]
  $region30: #{tpu_custom_call.1} parent=0
    _
  %s7 = ssub.s32 1, %s5
  %s8 = scalar_select 0, %s7, %s5
  $region1: #{tpu_custom_call.1} parent=0
    #allocation2 [shape = 'u8[86016]{0}', space=vmem, size = 0x15000, scoped, tag = 'input window, operand 2, single buffered']
    #allocation3 [shape = 's32[1]{0}', space=sflag, size = 0x4, scoped, tag = 'scoped memory for tpu_custom_call.1']
    #allocation4 [shape = 's32[1]{0}', space=sflag, size = 0x4, scoped, tag = 'scoped memory for tpu_custom_call.1']
    #allocation5 [shape = 'u8[4096]{0}', space=vmem, size = 0x1000, scoped, tag = 'output window, operand 0, single buffered']
    %9 = vsyncpa [#allocation3], 0
    %10 = vsyncpa [#allocation4], 0
    // Predicated region
    $region2: #{tpu_custom_call.1} parent=1 // pred_check
      _
    $region3: #{tpu_custom_call.1} parent=1 // pred_check_branch
      %12 = sbr.rel (0) target = $region5
    $region4: #{tpu_custom_call.1} parent=1 // pred_region
      _
    $region5: #{tpu_custom_call.1} parent=1 // pred_fallthru
      _
    // Predicated region
    $region6: #{tpu_custom_call.1} parent=1 // pred_check
      _
    $region7: #{tpu_custom_call.1} parent=1 // pred_check_branch
      %14 = sbr.rel (0) target = $region9
    $region8: #{tpu_custom_call.1} parent=1 // pred_region
      _
    $region9: #{tpu_custom_call.1} parent=1 // pred_fallthru
      _
    // Predicated region
    $region10: #{tpu_custom_call.1} parent=1 // pred_check
      _
    $region11: #{tpu_custom_call.1} parent=1 // pred_check_branch
      %16 = sbr.rel (0) target = $region13
    $region12: #{tpu_custom_call.1} parent=1 // pred_region
      %s18 = ssub.s32 2688, 2688
      %19 = vsyncadd [#allocation3], %s18
      %s20 = sshll.u32 [#allocation2], 4
      %s21 = int_to_ptr.vmem [resolvable:$true] %s20
      %26 = dma.hbm_to_vmem [thread:$0]  %s2, 2688, %s21, [#allocation3], 128, 128, 8
    $region13: #{tpu_custom_call.1} parent=1 // pred_fallthru
      _
    // Predicated region
    $region14: #{tpu_custom_call.1} parent=1 // pred_check
      _
    $region15: #{tpu_custom_call.1} parent=1 // pred_check_branch
      %28 = sbr.rel (0) target = $region17
    $region16: #{tpu_custom_call.1} parent=1 // pred_region
      _
    $region17: #{tpu_custom_call.1} parent=1 // pred_fallthru
      _
    // Predicated region
    $region18: #{tpu_custom_call.1} parent=1 // pred_check
      _
    $region19: #{tpu_custom_call.1} parent=1 // pred_check_branch
      %30 = sbr.rel (0) target = $region21
    $region20: #{tpu_custom_call.1} parent=1 // pred_region
      %31 = dma.done [#allocation3], 2688
    $region21: #{tpu_custom_call.1} parent=1 // pred_fallthru
      _
    %v32 = vld [vmem:[%s0] sm:$0xff]
    %v33 = vld [vmem:[%s1] sm:$0xff]
    %v34 = vld [vmem:[#allocation2] sm:$0xff]
    %v35 = vld [vmem:[#allocation2 + $0x8] sm:$0xff]
    %v36 = vld [vmem:[#allocation2 + $0x10] sm:$0xff]
    %v37 = vld [vmem:[#allocation2 + $0x18] sm:$0xff]
    %v38 = vld [vmem:[#allocation2 + $0x20] sm:$0xff]
    %v39 = vld [vmem:[#allocation2 + $0x28] sm:$0xff]
    %v40 = vld [vmem:[#allocation2 + $0x30] sm:$0xff]
    %v41 = vld [vmem:[#allocation2 + $0x38] sm:$0xff]
    %v42 = vld [vmem:[#allocation2 + $0x40] sm:$0xff]
    %v43 = vld [vmem:[#allocation2 + $0x48] sm:$0xff]
    %v44 = vld [vmem:[#allocation2 + $0x50] sm:$0xff]
    %v45 = vld [vmem:[#allocation2 + $0x58] sm:$0xff]
    %v46 = vld [vmem:[#allocation2 + $0x60] sm:$0xff]
    %v47 = vld [vmem:[#allocation2 + $0x68] sm:$0xff]
    %v48 = vld [vmem:[#allocation2 + $0x70] sm:$0xff]
    %v49 = vld [vmem:[#allocation2 + $0x78] sm:$0xff]
    %v50 = vld [vmem:[#allocation2 + $0x80] sm:$0xff]
    %v51 = vld [vmem:[#allocation2 + $0x88] sm:$0xff]
    %v52 = vld [vmem:[#allocation2 + $0x90] sm:$0xff]
    %v53 = vld [vmem:[#allocation2 + $0x98] sm:$0xff]
    %v54 = vld [vmem:[#allocation2 + $0xa0] sm:$0x1]
    %v55 = vld [vmem:[#allocation2 + $0xa1] sm:$0x1]
    %v56 = vld [vmem:[%s3] sm:$0xff]
    %v57 = vld [vmem:[%s3 + $0x8] sm:$0xff]
    %v58 = vld [vmem:[%s3 + $0x10] sm:$0xff]
    %v59 = vld [vmem:[%s3 + $0x18] sm:$0xff]
    %v60 = vld [vmem:[%s3 + $0x20] sm:$0xff]
    %v61 = vld [vmem:[%s3 + $0x28] sm:$0xff]
    %v62 = vld [vmem:[%s3 + $0x30] sm:$0xff]
    %v63 = vld [vmem:[%s3 + $0x38] sm:$0xff]
    %v64 = vld [vmem:[%s3 + $0x40] sm:$0xff]
    %v65 = vld [vmem:[%s3 + $0x48] sm:$0xff]
    %v66 = vld [vmem:[%s3 + $0x50] sm:$0xff]
    %v67 = vld [vmem:[%s3 + $0x58] sm:$0xff]
    %v68 = vld [vmem:[%s3 + $0x60] sm:$0xff]
    %v69 = vld [vmem:[%s3 + $0x68] sm:$0xff]
    %v70 = vld [vmem:[%s3 + $0x70] sm:$0xff]
    %v71 = vld [vmem:[%s3 + $0x78] sm:$0xff]
    %v72 = vld [vmem:[%s3 + $0x80] sm:$0x1]
    %v73 = vld [vmem:[%s3 + $0x81] sm:$0x1]
    %v74 = vld [vmem:[%s3 + $0x82] sm:$0x1]
    %v75 = vld [vmem:[%s3 + $0x83] sm:$0x1]
    %v76 = vld [vmem:[%s3 + $0x84] sm:$0x1]
    %v77 = vlaneseq
    %v78 = vshrl.u32 %v77, 7
    %v79 = vsub.s32 0, %v78
    %v80 = vrot.slane %v54, %v79
    %vm81 = vcmask 261120
    %v83 = vsel %vm81, %v32, 0
    %85 = vmatprep.subr.mxu0 0.0
    %86 = vmatpush1.msra.mxu0 0.0
    %87 = vmatprep.subr.mxu0 0.0
    %88 = vmatpush1.msra.mxu0 0.0
    %89 = vmatprep.subr.mxu0 0.0
    %90 = vmatpush1.msra.mxu0 0.0
    %91 = vmatprep.subr.mxu0 0.0
    %92 = vmatpush1.msra.mxu0 0.0
    %93 = vmatprep.subr.mxu0 0.0
    %94 = vmatpush1.msra.mxu0 0.0
    %95 = vmatprep.subr.mxu0 0.0
    %96 = vmatpush1.msra.mxu0 0.0
    %97 = vmatprep.subr.mxu0 0.0
    %98 = vmatpush1.msra.mxu0 0.0
    %99 = vmatprep.subr.mxu0 0.0
    %100 = vmatpush1.msra.mxu0 0.0
    %101 = vmatprep.subr.mxu0 0.0
    %102 = vmatpush1.msra.mxu0 0.0
    %103 = vmatprep.subr.mxu0 0.0
    %104 = vmatpush1.msra.mxu0 0.0
    %105 = vmatprep.subr.mxu0 0.0
    %106 = vmatpush1.msra.mxu0 0.0
    %107 = vmatprep.subr.mxu0 0.0
    %108 = vmatpush1.msra.mxu0 0.0
    %109 = vmatprep.subr.mxu0 0.0
    %110 = vmatpush1.msra.mxu0 %v37
    %111 = vmatprep.subr.mxu0 0.0
    %112 = vmatpush1.msra.mxu0 %v36
    %113 = vmatprep.subr.mxu0 0.0
    %114 = vmatpush1.msra.mxu0 %v35
    %115 = vmatprep.subr.mxu0 0.0
    %116 = vmatpush1.msra.mxu0 %v34
    %117 = vmatprep.subr.mxu0 0.0
    %118 = vmatpush2.msra.mxu0 0.0
    %119 = vmatprep.subr.mxu0 0.0
    %120 = vmatpush2.msra.mxu0 0.0
    %121 = vmatprep.subr.mxu0 0.0
    %122 = vmatpush2.msra.mxu0 0.0
    %123 = vmatprep.subr.mxu0 0.0
    %124 = vmatpush2.msra.mxu0 0.0
    %125 = vmatprep.subr.mxu0 0.0
    %126 = vmatpush2.msra.mxu0 0.0
    %127 = vmatprep.subr.mxu0 0.0
    %128 = vmatpush2.msra.mxu0 0.0
    %129 = vmatprep.subr.mxu0 0.0
    %130 = vmatpush2.msra.mxu0 0.0
    %131 = vmatprep.subr.mxu0 0.0
    %132 = vmatpush2.msra.mxu0 0.0
    %133 = vmatprep.subr.mxu0 0.0
    %134 = vmatpush2.msra.mxu0 0.0
    %135 = vmatprep.subr.mxu0 0.0
    %136 = vmatpush2.msra.mxu0 0.0
    %137 = vmatprep.subr.mxu0 0.0
    %138 = vmatpush2.msra.mxu0 0.0
    %139 = vmatprep.subr.mxu0 0.0
    %140 = vmatpush2.msra.mxu0 0.0
    %141 = vmatprep.subr.mxu0 0.0
    %142 = vmatpush2.msra.mxu0 0.0
    %143 = vmatprep.subr.mxu0 0.0
    %144 = vmatpush2.msra.mxu0 0.0
    %145 = vmatprep.subr.mxu0 0.0
    %146 = vmatpush2.msra.mxu0 0.0
    %147 = vmatprep.subr.mxu0 0.0
    %148 = vmatpush2.msra.mxu0 0.0
    %149 = vmatprep.mubr.f32.mxu0 0.0
    %150 = vmatmul.mubr.f32.gmra.mxu0 %v83
    %v151 = vpop.f32.mrf.mxu0
    %v152 = vadd.f32 %v80, %v151
    %v153 = vpop.f32.mrf.mxu0
    %154 = vdwg.mxu0
    %v155 = vtanh.pop %v152
    %v156 = vlaneseq
    %v157 = vshrl.u32 %v156, 7
    %v158 = vsub.s32 0, %v157
    %v159 = vrot.slane %v55, %v158
    %160 = vmatprep.subr.mxu0 0.0
    %161 = vmatpush1.msra.mxu0 %v53
    %162 = vmatprep.subr.mxu0 0.0
    %163 = vmatpush1.msra.mxu0 %v52
    %164 = vmatprep.subr.mxu0 0.0
    %165 = vmatpush1.msra.mxu0 %v51
    %166 = vmatprep.subr.mxu0 0.0
    %167 = vmatpush1.msra.mxu0 %v50
    %168 = vmatprep.subr.mxu0 0.0
    %169 = vmatpush1.msra.mxu0 %v49
    %170 = vmatprep.subr.mxu0 0.0
    %171 = vmatpush1.msra.mxu0 %v48
    %172 = vmatprep.subr.mxu0 0.0
    %173 = vmatpush1.msra.mxu0 %v47
    %174 = vmatprep.subr.mxu0 0.0
    %175 = vmatpush1.msra.mxu0 %v46
    %176 = vmatprep.subr.mxu0 0.0
    %177 = vmatpush1.msra.mxu0 %v45
    %178 = vmatprep.subr.mxu0 0.0
    %179 = vmatpush1.msra.mxu0 %v44
    %180 = vmatprep.subr.mxu0 0.0
    %181 = vmatpush1.msra.mxu0 %v43
    %182 = vmatprep.subr.mxu0 0.0
    %183 = vmatpush1.msra.mxu0 %v42
    %184 = vmatprep.subr.mxu0 0.0
    %185 = vmatpush1.msra.mxu0 %v41
    %186 = vmatprep.subr.mxu0 0.0
    %187 = vmatpush1.msra.mxu0 %v40
    %188 = vmatprep.subr.mxu0 0.0
    %189 = vmatpush1.msra.mxu0 %v39
    %190 = vmatprep.subr.mxu0 0.0
    %191 = vmatpush1.msra.mxu0 %v38
    %192 = vmatprep.subr.mxu0 0.0
    %193 = vmatpush2.msra.mxu0 0.0
    %194 = vmatprep.subr.mxu0 0.0
    %195 = vmatpush2.msra.mxu0 0.0
    %196 = vmatprep.subr.mxu0 0.0
    %197 = vmatpush2.msra.mxu0 0.0
    %198 = vmatprep.subr.mxu0 0.0
    %199 = vmatpush2.msra.mxu0 0.0
    %200 = vmatprep.subr.mxu0 0.0
    %201 = vmatpush2.msra.mxu0 0.0
    %202 = vmatprep.subr.mxu0 0.0
    %203 = vmatpush2.msra.mxu0 0.0
    %204 = vmatprep.subr.mxu0 0.0
    %205 = vmatpush2.msra.mxu0 0.0
    %206 = vmatprep.subr.mxu0 0.0
    %207 = vmatpush2.msra.mxu0 0.0
    %208 = vmatprep.subr.mxu0 0.0
    %209 = vmatpush2.msra.mxu0 0.0
    %210 = vmatprep.subr.mxu0 0.0
    %211 = vmatpush2.msra.mxu0 0.0
    %212 = vmatprep.subr.mxu0 0.0
    %213 = vmatpush2.msra.mxu0 0.0
    %214 = vmatprep.subr.mxu0 0.0
    %215 = vmatpush2.msra.mxu0 0.0
    %216 = vmatprep.subr.mxu0 0.0
    %217 = vmatpush2.msra.mxu0 0.0
    %218 = vmatprep.subr.mxu0 0.0
    %219 = vmatpush2.msra.mxu0 0.0
    %220 = vmatprep.subr.mxu0 0.0
    %221 = vmatpush2.msra.mxu0 0.0
    %222 = vmatprep.subr.mxu0 0.0
    %223 = vmatpush2.msra.mxu0 0.0
    %224 = vmatprep.mubr.f32.mxu0 0.0
    %225 = vmatmul.mubr.f32.gmra.mxu0 %v155
    %v226 = vpop.f32.mrf.mxu0
    %v227 = vadd.f32 %v159, %v226
    %v228 = vpop.f32.mrf.mxu0
    %229 = vdwg.mxu0
    %v230 = vtanh.pop %v227
    %v231 = vlaneseq
    %v232 = vshrl.u32 %v231, 7
    %v233 = vsub.s32 0, %v232
    %v234 = vrot.slane %v72, %v233
    %235 = vmatprep.subr.mxu0 0.0
    %236 = vmatpush1.msra.mxu0 %v71
    %237 = vmatprep.subr.mxu0 0.0
    %238 = vmatpush1.msra.mxu0 %v70
    %239 = vmatprep.subr.mxu0 0.0
    %240 = vmatpush1.msra.mxu0 %v69
    %241 = vmatprep.subr.mxu0 0.0
    %242 = vmatpush1.msra.mxu0 %v68
    %243 = vmatprep.subr.mxu0 0.0
    %244 = vmatpush1.msra.mxu0 %v67
    %245 = vmatprep.subr.mxu0 0.0
    %246 = vmatpush1.msra.mxu0 %v66
    %247 = vmatprep.subr.mxu0 0.0
    %248 = vmatpush1.msra.mxu0 %v65
    %249 = vmatprep.subr.mxu0 0.0
    %250 = vmatpush1.msra.mxu0 %v64
    %251 = vmatprep.subr.mxu0 0.0
    %252 = vmatpush1.msra.mxu0 %v63
    %253 = vmatprep.subr.mxu0 0.0
    %254 = vmatpush1.msra.mxu0 %v62
    %255 = vmatprep.subr.mxu0 0.0
    %256 = vmatpush1.msra.mxu0 %v61
    %257 = vmatprep.subr.mxu0 0.0
    %258 = vmatpush1.msra.mxu0 %v60
    %259 = vmatprep.subr.mxu0 0.0
    %260 = vmatpush1.msra.mxu0 %v59
    %261 = vmatprep.subr.mxu0 0.0
    %262 = vmatpush1.msra.mxu0 %v58
    %263 = vmatprep.subr.mxu0 0.0
    %264 = vmatpush1.msra.mxu0 %v57
    %265 = vmatprep.subr.mxu0 0.0
    %266 = vmatpush1.msra.mxu0 %v56
    %267 = vmatprep.subr.mxu0 0.0
    %268 = vmatpush2.msra.mxu0 0.0
    %269 = vmatprep.subr.mxu0 0.0
    %270 = vmatpush2.msra.mxu0 0.0
    %271 = vmatprep.subr.mxu0 0.0
    %272 = vmatpush2.msra.mxu0 0.0
    %273 = vmatprep.subr.mxu0 0.0
    %274 = vmatpush2.msra.mxu0 0.0
    %275 = vmatprep.subr.mxu0 0.0
    %276 = vmatpush2.msra.mxu0 0.0
    %277 = vmatprep.subr.mxu0 0.0
    %278 = vmatpush2.msra.mxu0 0.0
    %279 = vmatprep.subr.mxu0 0.0
    %280 = vmatpush2.msra.mxu0 0.0
    %281 = vmatprep.subr.mxu0 0.0
    %282 = vmatpush2.msra.mxu0 0.0
    %283 = vmatprep.subr.mxu0 0.0
    %284 = vmatpush2.msra.mxu0 0.0
    %285 = vmatprep.subr.mxu0 0.0
    %286 = vmatpush2.msra.mxu0 0.0
    %287 = vmatprep.subr.mxu0 0.0
    %288 = vmatpush2.msra.mxu0 0.0
    %289 = vmatprep.subr.mxu0 0.0
    %290 = vmatpush2.msra.mxu0 0.0
    %291 = vmatprep.subr.mxu0 0.0
    %292 = vmatpush2.msra.mxu0 0.0
    %293 = vmatprep.subr.mxu0 0.0
    %294 = vmatpush2.msra.mxu0 0.0
    %295 = vmatprep.subr.mxu0 0.0
    %296 = vmatpush2.msra.mxu0 0.0
    %297 = vmatprep.subr.mxu0 0.0
    %298 = vmatpush2.msra.mxu0 0.0
    %299 = vmatprep.mubr.f32.mxu0 0.0
    %300 = vmatmul.mubr.f32.gmra.mxu0 %v230
    %v301 = vpop.f32.mrf.mxu0
    %v302 = vadd.f32 %v234, %v301
    %v303 = vpop.f32.mrf.mxu0
    %304 = vdwg.mxu0
    %v305 = vxor.u32 %v302, 2147483648
    %v306 = vmul.f32 %v305, 1.442695
    %v307 = vpow.pop %v306
    %v308 = vadd.f32 %v307, 1.0
    %v309 = vrcp.pop %v308
    %v310 = vmul.f32 1.0, %v309
    %v311 = vsub.f32 %v33, %v310
    %v312 = vmul.f32 %v311, %v311
    %v313 = vlaneseq
    %v314 = vshrl.u32 %v313, 7
    %v315 = vsub.s32 0, %v314
    %v316 = vrot.slane %v73, %v315
    %v317 = vmul.f32 %v312, %v316
    %vm318 = vcmask 64512
    %v319 = vsel %vm318, %v317, 0.0
    %320 = vadd.xlane.f32.xlu0 %v319
    %v321 = vpop.xlane.xlu0 %320
    %v322 = vlaneseq
    %v323 = vshrl.u32 %v322, 7
    %v324 = vsub.s32 0, %v323
    %v325 = vrot.slane %v74, %v324
    %v326 = vmul.f32 %v302, %v325
    %v327 = vlaneseq
    %v328 = vshrl.u32 %v327, 7
    %v329 = vsub.s32 0, %v328
    %v330 = vrot.slane %v76, %v329
    %v331 = vadd.f32 %v326, %v330
    %v332 = vmul.f32 %v321, 0.5
    %v333 = vlaneseq
    %v334 = vshrl.u32 %v333, 7
    %v335 = vsub.s32 0, %v334
    %v336 = vrot.slane %v75, %v335
    %v337 = vmul.f32 %v332, %v336
    %v338 = vsub.f32 %v331, %v337
    %339 = vst.msk [vmem:[#allocation5] sm:$0xff] %vm318, %v338
    // Predicated region
    $region22: #{tpu_custom_call.1} parent=1 // pred_check
      _
    $region23: #{tpu_custom_call.1} parent=1 // pred_check_branch
      %341 = sbr.rel (0) target = $region25
    $region24: #{tpu_custom_call.1} parent=1 // pred_region
      %s343 = ssub.s32 128, 128
      %344 = vsyncadd [#allocation4], %s343
      %s346 = sshll.u32 [#allocation5], 4
      %s347 = int_to_ptr.vmem [resolvable:$true] %s346
      %349 = dma.vmem_to_hbm [thread:$0]  %s347, 128, %s4, [#allocation4]
    $region25: #{tpu_custom_call.1} parent=1 // pred_fallthru
      _
    // Predicated region
    $region26: #{tpu_custom_call.1} parent=1 // pred_check
      _
    $region27: #{tpu_custom_call.1} parent=1 // pred_check_branch
      %351 = sbr.rel (0) target = $region29
    $region28: #{tpu_custom_call.1} parent=1 // pred_region
      %352 = dma.done [#allocation4], 128
    $region29: #{tpu_custom_call.1} parent=1 // pred_fallthru
      _
    %353 = vsyncpa [#allocation3], 1
    %354 = vsyncpa [#allocation4], 1

</llo_original>
